<compile_context>
chip_gen: v5e
topology: v5e:2x2
jax: 0.10.0
libtpu: 0.0.40
codegen_flags: <defaults>
</compile_context>

<pallas_src>
import math

import jax
import jax.numpy as jnp
from jax.experimental import pallas as pl
from jax.experimental.pallas import tpu as pltpu


_TARGET_BLOCK_BYTES = 2 << 20   # ~2 MiB x-block per grid step (soft target)
_MIN_GRID_STEPS = 4             # keep enough steps for double-buffering / megacore
_VMEM_LIMIT_BYTES = 48 << 20    # explicit scoped-VMEM limit; < v7x 64 MiB physical


def _cdiv(a, b):
    return -(-a // b)


def _lcm(a, b):
    return a * b // math.gcd(a, b)


def _choose_blocks(B, C, T, KK, itemsize, target_bytes, min_steps):
    """Pick (Bb, Cb, Tb) block sizes for the (B, C, T) layout.

    Constraints honored:
      * Cb is a multiple of 8 or equals C (TPU (8,128) rule; partial last
        channel block is fine, it is masked).
      * Tb is a multiple of lcm(KK, 128) or equals T: lane-dense blocks whose
        start offsets are KK-phase aligned, so one expanded bias scratch is
        valid for every T chunk.
    """
    unit_t = _lcm(KK, 128)
    cb_min = C if C < 8 else 8

    # Case A: even the smallest legal channel chunk over full T blows the
    # budget -> split T into phase-aligned, lane-dense chunks.
    if cb_min * T * itemsize > target_bytes and T > unit_t:
        n_units = max(1, target_bytes // (cb_min * unit_t * itemsize))
        tb = min(T, n_units * unit_t)
        return 1, cb_min, tb

    # Case B: full-T rows; grow the channel chunk up to the budget.
    if C * T * itemsize <= target_bytes:
        cb = C
    else:
        cb = cb_min
        best_div = None
        c = 8
        while c <= C and c * T * itemsize <= target_bytes:
            cb = c
            if C % c == 0:
                best_div = c
            c += 8
        # Prefer a chunk that divides C exactly (better load balance) unless it
        # costs more than 2x in block size.
        if best_div is not None and best_div * 2 >= cb:
            cb = best_div

    # Merge batches only while a block stays under budget AND enough grid steps
    # remain for pipelining / TensorCore sharding.
    bb = 1
    if cb == C:
        c_steps = _cdiv(C, cb)
        for cand in range(2, B + 1):
            if B % cand != 0:
                continue
            if cand * C * T * itemsize > target_bytes:
                break
            if (B // cand) * c_steps < min_steps:
                break
            bb = cand

    # If the grid is still too small to pipeline, split T (lane-dense,
    # phase-aligned) to restore a few steps.
    tb = T
    steps = _cdiv(C, cb) * (B // bb)
    if steps < min_steps and T >= 2 * unit_t:
        t_units = _cdiv(T, unit_t)
        want = min(t_units, _cdiv(min_steps, steps))
        tb = unit_t * _cdiv(t_units, want)
    return bb, cb, tb


def _make_kernel(KK, Tb, out_dtype):
    def kernel(x_ref, bias_ref, o_ref, scr_ref):
        # Expand the compact per-channel bias (Cb, KK) into the KK-periodic
        # (Cb, Tb) VMEM scratch with log2(Tb/KK) doubling copies (all slices
        # are static).  Guarded on the innermost (T-chunk) axis only, so it is
        # correct no matter how the compiler shards/reorders the two outer
        # "parallel" axes across TensorCores; the copy is pure VMEM traffic
        # (~1/Bb of the step's store work) and hides under the HBM-bound DMAs.
        @pl.when(pl.program_id(2) == 0)
        def _():
            scr_ref[:, pl.ds(0, KK)] = bias_ref[...]
            filled = KK
            while filled < Tb:                    # static, trace-time loop
                chunk = min(filled, Tb - filled)
                scr_ref[:, pl.ds(filled, chunk)] = scr_ref[:, pl.ds(0, chunk)]
                filled += chunk

        x = x_ref[...]
        if x.dtype != out_dtype:
            x = x.astype(out_dtype)               # PyTorch-style promotion
        o_ref[...] = x + scr_ref[...][None, :, :]
    return kernel


def learnable_positional_encoding(k_out, rel_h, rel_w, *,
                                  target_block_bytes=_TARGET_BLOCK_BYTES,
                                  donate_k_out=False):
    """k_out: (B, C, H, W, K, K); rel_h: (C//2, 1, 1, K, 1); rel_w: (C//2, 1, 1, 1, K)."""
    B, C, H, W, K, K2 = k_out.shape
    assert K == K2
    assert C % 2 == 0
    half = C // 2
    assert rel_h.shape == (half, 1, 1, K, 1)
    assert rel_w.shape == (half, 1, 1, 1, K)

    KK = K * K
    T = H * W * KK
    out_dtype = jnp.promote_types(k_out.dtype,
                                  jnp.promote_types(rel_h.dtype, rel_w.dtype))

    # ---- glue: compact per-channel bias over the (K, K) window: (C, K*K) ----
    # First half of the channels follows rel_h (varies along the first K axis),
    # second half rel_w (varies along the second K axis) — the torch broadcast.
    bias_h = jnp.broadcast_to(rel_h.reshape(half, K, 1), (half, K, K))
    bias_w = jnp.broadcast_to(rel_w.reshape(half, 1, K), (half, K, K))
    bias_c = jnp.concatenate([bias_h, bias_w], axis=0).reshape(C, KK)
    bias_c = bias_c.astype(out_dtype)

    # Row-major reshape is free and keeps every block lane-dense.
    x = k_out.reshape(B, C, T)

    itemsize = max(jnp.dtype(k_out.dtype).itemsize, jnp.dtype(out_dtype).itemsize)
    Bb, Cb, Tb = _choose_blocks(B, C, T, KK, itemsize, target_block_bytes,
                                _MIN_GRID_STEPS)
    grid = (_cdiv(C, Cb), B // Bb, _cdiv(T, Tb))

    # Optional aliasing: the op is effectively x += bias, so callers that can
    # donate k_out avoid a second B*C*T HBM allocation.  Only valid when no
    # dtype promotion happens.
    alias = {0: 0} if (donate_k_out and out_dtype == k_out.dtype) else {}

    out = pl.pallas_call(
        _make_kernel(KK, Tb, out_dtype),
        out_shape=jax.ShapeDtypeStruct((B, C, T), out_dtype),
        grid_spec=pltpu.PrefetchScalarGridSpec(
            num_scalar_prefetch=0,
            grid=grid,
            in_specs=[
                pl.BlockSpec((Bb, Cb, Tb), lambda ci, bi, ti: (bi, ci, ti)),
                pl.BlockSpec((Cb, KK), lambda ci, bi, ti: (ci, 0)),
            ],
            out_specs=pl.BlockSpec((Bb, Cb, Tb), lambda ci, bi, ti: (bi, ci, ti)),
            scratch_shapes=[pltpu.VMEM((Cb, Tb), out_dtype)],
        ),
        compiler_params=pltpu.CompilerParams(
            dimension_semantics=("parallel", "parallel", "arbitrary"),
            vmem_limit_bytes=_VMEM_LIMIT_BYTES),
        input_output_aliases=alias,
    )(x, bias_c)

    return out.reshape(B, C, H, W, K, K)


def _reference(k_out, rel_h, rel_w):
    C = k_out.shape[1]
    half = C // 2
    return jnp.concatenate(
        [k_out[:, :half] + rel_h[None], k_out[:, half:] + rel_w[None]], axis=1)


if __name__ == "__main__":
    def run_case(key, B, C, H, W, K, dtype, target_bytes):
        half = C // 2
        k1, k2, k3 = jax.random.split(key, 3)
        rel_h = jax.random.normal(k1, (half, 1, 1, K, 1), dtype=jnp.float32)
        rel_w = jax.random.normal(k2, (half, 1, 1, 1, K), dtype=jnp.float32)
        k_out = jax.random.normal(
            k3, (B, C, H, W, K, K), dtype=jnp.float32).astype(dtype)

        out = learnable_positional_encoding(
            k_out, rel_h, rel_w, target_block_bytes=target_bytes)
        out = jax.block_until_ready(out)

        ref = _reference(k_out, rel_h, rel_w)
        assert out.shape == ref.shape
        assert out.dtype == ref.dtype
        assert jnp.allclose(out, ref, atol=1e-6, rtol=1e-6)

    key = jax.random.PRNGKey(0)
    k1, k2, k3 = jax.random.split(key, 3)

    # 1) Default small SASA-like shape (exercises the min-step T split).
    run_case(k1, B=2, C=4, H=8, W=8, K=4, dtype=jnp.float32,
             target_bytes=_TARGET_BLOCK_BYTES)
    # 2) Stress the tiling paths at small size with a tiny block budget:
    #    channel chunks with a partial last chunk (C=20, Cb=8), T split with a
    #    partial tail, odd K*K=9 phase alignment.
    run_case(k2, B=2, C=20, H=12, W=12, K=3, dtype=jnp.float32,
             target_bytes=32 * 1024)
    # 3) dtype-promotion path: bf16 k_out + f32 params -> f32 output (PyTorch).
    run_case(k3, B=2, C=4, H=8, W=8, K=4, dtype=jnp.bfloat16,
             target_bytes=_TARGET_BLOCK_BYTES)

    print("KERNEL_OK")
</pallas_src>

<mosaic_0001>
module attributes {stable_mosaic.version = 11 : i64} {
  func.func @kernel(%arg0: i32, %arg1: i32, %arg2: i32, %arg3: memref<1x4x512xf32, #tpu.memory_space<vmem>>, %arg4: memref<4x16xf32, #tpu.memory_space<vmem>>, %arg5: memref<1x4x512xf32, #tpu.memory_space<vmem>>, %arg6: memref<4x512xf32, #tpu.memory_space<vmem>>) attributes {dimension_semantics = [#tpu.dimension_semantics<parallel>, #tpu.dimension_semantics<parallel>, #tpu.dimension_semantics<arbitrary>], iteration_bounds = array<i64: 1, 2, 2>, scalar_prefetch = 0 : i64, scratch_operands = 1 : i64, tpu.core_type = #tpu.core_type<tc>, window_params = [{transform_indices = @transform_0, window_bounds = array<i64: 1, 4, 512>}, {transform_indices = @transform_1, window_bounds = array<i64: 4, 16>}, {transform_indices = @transform_2, window_bounds = array<i64: 1, 4, 512>}]} {
    %c0_i32 = arith.constant 0 : i32
    %0 = arith.cmpi eq, %arg2, %c0_i32 : i32
    %1 = arith.extui %0 : i1 to i32
    %c0_i32_0 = arith.constant 0 : i32
    %2 = arith.cmpi ne, %1, %c0_i32_0 : i32
    scf.if %2 {
      %c0_8 = arith.constant 0 : index
      %c0_9 = arith.constant 0 : index
      %8 = vector.load %arg4[%c0_8, %c0_9] : memref<4x16xf32, #tpu.memory_space<vmem>>, vector<4x16xf32>
      %c0_10 = arith.constant 0 : index
      %c0_11 = arith.constant 0 : index
      %9 = vector.load %arg6[%c0_10, %c0_11] : memref<4x512xf32, #tpu.memory_space<vmem>>, vector<4x16xf32>
      tpu.vector_store %arg6[%c0_10, %c0_11], %8 {strides = array<i32>} : memref<4x512xf32, #tpu.memory_space<vmem>>, vector<4x16xf32>,
      %c0_12 = arith.constant 0 : index
      %c0_13 = arith.constant 0 : index
      %10 = vector.load %arg6[%c0_12, %c0_13] : memref<4x512xf32, #tpu.memory_space<vmem>>, vector<4x16xf32>
      %c0_14 = arith.constant 0 : index
      %c16 = arith.constant 16 : index
      %11 = vector.load %arg6[%c0_14, %c16] : memref<4x512xf32, #tpu.memory_space<vmem>>, vector<4x16xf32>
      tpu.vector_store %arg6[%c0_14, %c16], %10 {strides = array<i32>} : memref<4x512xf32, #tpu.memory_space<vmem>>, vector<4x16xf32>,
      %c0_15 = arith.constant 0 : index
      %c0_16 = arith.constant 0 : index
      %12 = vector.load %arg6[%c0_15, %c0_16] : memref<4x512xf32, #tpu.memory_space<vmem>>, vector<4x32xf32>
      %c0_17 = arith.constant 0 : index
      %c32 = arith.constant 32 : index
      %13 = vector.load %arg6[%c0_17, %c32] : memref<4x512xf32, #tpu.memory_space<vmem>>, vector<4x32xf32>
      tpu.vector_store %arg6[%c0_17, %c32], %12 {strides = array<i32>} : memref<4x512xf32, #tpu.memory_space<vmem>>, vector<4x32xf32>,
      %c0_18 = arith.constant 0 : index
      %c0_19 = arith.constant 0 : index
      %14 = vector.load %arg6[%c0_18, %c0_19] : memref<4x512xf32, #tpu.memory_space<vmem>>, vector<4x64xf32>
      %c0_20 = arith.constant 0 : index
      %c64 = arith.constant 64 : index
      %15 = vector.load %arg6[%c0_20, %c64] : memref<4x512xf32, #tpu.memory_space<vmem>>, vector<4x64xf32>
      tpu.vector_store %arg6[%c0_20, %c64], %14 {strides = array<i32>} : memref<4x512xf32, #tpu.memory_space<vmem>>, vector<4x64xf32>,
      %c0_21 = arith.constant 0 : index
      %c0_22 = arith.constant 0 : index
      %16 = vector.load %arg6[%c0_21, %c0_22] : memref<4x512xf32, #tpu.memory_space<vmem>>, vector<4x128xf32>
      %c0_23 = arith.constant 0 : index
      %c128 = arith.constant 128 : index
      %17 = vector.load %arg6[%c0_23, %c128] : memref<4x512xf32, #tpu.memory_space<vmem>>, vector<4x128xf32>
      tpu.vector_store %arg6[%c0_23, %c128], %16 {strides = array<i32>} : memref<4x512xf32, #tpu.memory_space<vmem>>, vector<4x128xf32>,
      %c0_24 = arith.constant 0 : index
      %c0_25 = arith.constant 0 : index
      %18 = vector.load %arg6[%c0_24, %c0_25] : memref<4x512xf32, #tpu.memory_space<vmem>>, vector<4x256xf32>
      %c0_26 = arith.constant 0 : index
      %c256 = arith.constant 256 : index
      %19 = vector.load %arg6[%c0_26, %c256] : memref<4x512xf32, #tpu.memory_space<vmem>>, vector<4x256xf32>
      tpu.vector_store %arg6[%c0_26, %c256], %18 {strides = array<i32>} : memref<4x512xf32, #tpu.memory_space<vmem>>, vector<4x256xf32>,
    } else {
    }
    %c0 = arith.constant 0 : index
    %c0_1 = arith.constant 0 : index
    %c0_2 = arith.constant 0 : index
    %3 = vector.load %arg3[%c0, %c0_1, %c0_2] : memref<1x4x512xf32, #tpu.memory_space<vmem>>, vector<1x4x512xf32>
    %c0_3 = arith.constant 0 : index
    %c0_4 = arith.constant 0 : index
    %4 = vector.load %arg6[%c0_3, %c0_4] : memref<4x512xf32, #tpu.memory_space<vmem>>, vector<4x512xf32>
    %5 = vector.shape_cast %4 : vector<4x512xf32> to vector<1x4x512xf32>
    %6 = arith.addf %3, %5 : vector<1x4x512xf32>
    %c0_5 = arith.constant 0 : index
    %c0_6 = arith.constant 0 : index
    %c0_7 = arith.constant 0 : index
    %7 = vector.load %arg5[%c0_5, %c0_6, %c0_7] : memref<1x4x512xf32, #tpu.memory_space<vmem>>, vector<1x4x512xf32>
    tpu.vector_store %arg5[%c0_5, %c0_6, %c0_7], %6 {strides = array<i32>} : memref<1x4x512xf32, #tpu.memory_space<vmem>>, vector<1x4x512xf32>,
    return
  }
  func.func @transform_0(%arg0: i32, %arg1: i32, %arg2: i32) -> (i32, i32, i32) {
    %c0_i32 = arith.constant 0 : i32
    return %arg1, %arg0, %arg2 : i32, i32, i32
  }
  func.func @transform_1(%arg0: i32, %arg1: i32, %arg2: i32) -> (i32, i32) {
    %c0_i32 = arith.constant 0 : i32
    %c0_i32_0 = arith.constant 0 : i32
    return %arg0, %c0_i32 : i32, i32
  }
  func.func @transform_2(%arg0: i32, %arg1: i32, %arg2: i32) -> (i32, i32, i32) {
    %c0_i32 = arith.constant 0 : i32
    return %arg1, %arg0, %arg2 : i32, i32, i32
  }
}

</mosaic_0001>

<llo_original>
// kernel: tpu_custom_call.1
$region0: #{tpu_custom_call.1}
  #allocation0 [shape = 'u32[]', space=smem, size = 0x4, offset = 0x4, fixed_abs, tag = 'smem constant byte address 0x4 - core index']
  #allocation1 [shape = 'u32[72,128]{1,0:T(1,128)}', space=vmem, size = 0x9000, scoped, tag = 'internal scratch']
  #allocation2 [shape = 'f32[4,512]{1,0:T(4,128)}', space=vmem, size = 0x2000, scoped, tag = 'scratch operand']
  %s0 = inlined_call_operand.hbm [shape: f32[2,4,1024], index: 0, kind: input, shape index: {}]
  %s1 = inlined_call_operand.hbm [shape: f32[4,16], index: 1, kind: input, shape index: {}]
  %s2 = inlined_call_operand.hbm [shape: f32[2,4,1024], index: 2, kind: output, shape index: {}]
  %s3 = sld [smem:[#allocation0]]
  $region53: #{tpu_custom_call.1} parent=0
    _
  %s5 = ssub.s32 1, %s3
  %s6 = scalar_select 0, %s5, %s3
  $region1: #{tpu_custom_call.1} parent=0
    #allocation3 [shape = 'u8[16384]{0}', space=vmem, size = 0x4000, scoped, tag = 'input window, operand 0']
    #allocation4 [shape = 's32[2]{0}', space=sflag, size = 0x8, scoped, tag = 'scoped memory for tpu_custom_call.1']
    #allocation5 [shape = 's32[2]{0}', space=sflag, size = 0x8, scoped, tag = 'scoped memory for tpu_custom_call.1']
    #allocation6 [shape = 'u8[2048]{0}', space=vmem, size = 0x800, scoped, tag = 'input window, operand 1, single buffered']
    #allocation7 [shape = 's32[1]{0}', space=sflag, size = 0x4, scoped, tag = 'scoped memory for tpu_custom_call.1']
    #allocation8 [shape = 'u8[16384]{0}', space=vmem, size = 0x4000, scoped, tag = 'output window, operand 0']
    %7 = vsyncpa [#allocation4], 0
    %s8 = scalar_lea.sflag [#allocation4], 1
    %9 = vsyncpa %s8, 0
    %10 = vsyncpa [#allocation7], 0
    %11 = vsyncpa [#allocation5], 0
    %s12 = scalar_lea.sflag [#allocation5], 1
    %13 = vsyncpa %s12, 0
    loop: start=0, step=1, limit=6
    $region2: #{tpu_custom_call.1} parent=1 // loop_pre_header
      _
    $region3: #{tpu_custom_call.1} parent=1 // loop_header
      %s15 = sphi 0, %s19
      %p16 = scmp.ge.s32.totalorder %s15, 6
      %s22 = sphi 0, %s41
      %s23 = sphi 0, %s37
      %s24 = sphi 0, %s33
      %s25 = sphi 0, %s22
      %s26 = sphi 0, %s23
      %s27 = sphi 0, %s24
      %s28 = sphi 0, %s25
      %s29 = sphi 0, %s26
      %s30 = sphi 0, %s27
      %s48 = sphi 0, %s50
      %s51 = sphi 0, %s48
      %s52 = sphi 0, %s51
      %s68 = sphi 0, %s52
      %s74 = sphi 0, %s76
      %s77 = sphi 0, %s74
      %s78 = sphi 0, %s77
      %s94 = sphi 0, %s78
      %s104 = sphi 0, %s106
      %s107 = sphi 0, %s104
      %s108 = sphi 0, %s107
      %s124 = sphi 0, %s108
    $region4: #{tpu_custom_call.1} parent=1 // loop_header_branch
      %18 = sbr.rel (%p16) target = $region8
    $region5: #{tpu_custom_call.1} parent=1 // loop_body
      %s20 = ssub.s32 %s15, 1
      %s21 = ssub.s32 %s15, 2
      %s31 = sadd.s32 1, %s24
      %p32 = scmp.ge.s32.totalorder %s31, 2
      %s33 = scalar_select %p32, 0, %s31
      %s34 = sadd.s32 1, %s23
      %s35 = scalar_select %p32, %s34, %s23
      %p36 = scmp.ge.s32.totalorder %s35, 2
      %s37 = scalar_select %p36, 0, %s35
      %s38 = sadd.s32 1, %s22
      %s39 = scalar_select %p36, %s38, %s22
      %p40 = scmp.ge.s32.totalorder %s39, 1
      %s41 = scalar_select %p40, 0, %s39
      %s42 = ssub.s32 %s23, %s37
      %s43 = ssub.s32 %s22, %s41
      %s44 = sor.u32 %s42, %s43
      %s45 = ssub.s32 %s24, %s33
      %s46 = sor.u32 %s44, %s45
      %p47 = scmp.eq.s32.totalorder %s46, 0
      %s49 = sadd.s32 %s48, 1
      %s50 = scalar_select %p47, %s48, %s49
      %p53 = pneg %p47
      %p54 = scmp.eq.s32.totalorder %s15, 3
      %p55 = por %p53, %p54
      %p56 = scmp.ne.s32.totalorder %s48, %s51
      %p57 = scmp.eq.s32.totalorder %s15, 0
      %p58 = por %p56, %p57
      %p59 = scmp.ne.s32.totalorder %s48, %s51
      %p60 = scmp.eq.s32.totalorder %s20, 3
      %p61 = por %p59, %p60
      %p62 = scmp.ne.s32.totalorder %s51, %s52
      %p63 = scmp.eq.s32.totalorder %s20, 0
      %p64 = por %p62, %p63
      %p65 = scmp.ne.s32.totalorder %s51, %s52
      %p66 = scmp.eq.s32.totalorder %s21, 3
      %p67 = por %p65, %p66
      %p69 = scmp.ne.s32.totalorder %s52, %s68
      %p70 = scmp.eq.s32.totalorder %s21, 0
      %p71 = por %p69, %p70
      %s72 = ssub.s32 %s22, %s41
      %p73 = scmp.eq.s32.totalorder %s72, 0
      %s75 = sadd.s32 %s74, 1
      %s76 = scalar_select %p73, %s74, %s75
      %p79 = pneg %p73
      %p80 = scmp.eq.s32.totalorder %s15, 3
      %p81 = por %p79, %p80
      %p82 = scmp.ne.s32.totalorder %s74, %s77
      %p83 = scmp.eq.s32.totalorder %s15, 0
      %p84 = por %p82, %p83
      %p85 = scmp.ne.s32.totalorder %s74, %s77
      %p86 = scmp.eq.s32.totalorder %s20, 3
      %p87 = por %p85, %p86
      %p88 = scmp.ne.s32.totalorder %s77, %s78
      %p89 = scmp.eq.s32.totalorder %s20, 0
      %p90 = por %p88, %p89
      %p91 = scmp.ne.s32.totalorder %s77, %s78
      %p92 = scmp.eq.s32.totalorder %s21, 3
      %p93 = por %p91, %p92
      %p95 = scmp.ne.s32.totalorder %s78, %s94
      %p96 = scmp.eq.s32.totalorder %s21, 0
      %p97 = por %p95, %p96
      %s98 = ssub.s32 %s23, %s37
      %s99 = ssub.s32 %s22, %s41
      %s100 = sor.u32 %s98, %s99
      %s101 = ssub.s32 %s24, %s33
      %s102 = sor.u32 %s100, %s101
      %p103 = scmp.eq.s32.totalorder %s102, 0
      %s105 = sadd.s32 %s104, 1
      %s106 = scalar_select %p103, %s104, %s105
      %p109 = pneg %p103
      %p110 = scmp.eq.s32.totalorder %s15, 3
      %p111 = por %p109, %p110
      %p112 = scmp.ne.s32.totalorder %s104, %s107
      %p113 = scmp.eq.s32.totalorder %s15, 0
      %p114 = por %p112, %p113
      %p115 = scmp.ne.s32.totalorder %s104, %s107
      %p116 = scmp.eq.s32.totalorder %s20, 3
      %p117 = por %p115, %p116
      %p118 = scmp.ne.s32.totalorder %s107, %s108
      %p119 = scmp.eq.s32.totalorder %s20, 0
      %p120 = por %p118, %p119
      %p121 = scmp.ne.s32.totalorder %s107, %s108
      %p122 = scmp.eq.s32.totalorder %s21, 3
      %p123 = por %p121, %p122
      %p125 = scmp.ne.s32.totalorder %s108, %s124
      %p126 = scmp.eq.s32.totalorder %s21, 0
      %p127 = por %p125, %p126
      %p128 = scmp.le.s32.totalorder 1, %s15
      %p129 = scmp.lt.s32.totalorder %s15, 5
      %p130 = pnand %p128, %p129
      %p131 = pneg %p130
      // Predicated region
      $region9: #{tpu_custom_call.1} parent=5 // pred_check
        _
      $region10: #{tpu_custom_call.1} parent=5 // pred_check_branch
        %133 = sbr.rel (%p130) target = $region12
      $region11: #{tpu_custom_call.1} parent=5 // pred_region
        %s134 = ssub.s32 %s15, 1
        // Predicated region
        $region13: #{tpu_custom_call.1} parent=11 // pred_check
          %p135 = pneg %p90
        $region14: #{tpu_custom_call.1} parent=11 // pred_check_branch
          %137 = sbr.rel (%p135) target = $region16
        $region15: #{tpu_custom_call.1} parent=11 // pred_region
          %139 = vsyncadd [#allocation7], 0
          %s140 = smul.addr %s25, 4
          %s141 = scalar_lea.hbm %s1, %s140
          %s143 = sshll.u32 %s141, 4
          %s144 = int_to_ptr.hbm [resolvable:$true] %s143
          %s145 = sshll.u32 [#allocation6], 4
          %s146 = int_to_ptr.vmem [resolvable:$true] %s145
          %148 = dma.hbm_to_vmem [thread:$0]  %s144, 64, %s146, [#allocation7]
        $region16: #{tpu_custom_call.1} parent=11 // pred_fallthru
          _
      $region12: #{tpu_custom_call.1} parent=5 // pred_fallthru
        _
      %p149 = scmp.lt.s32.totalorder %s15, 4
      // Predicated region
      $region17: #{tpu_custom_call.1} parent=5 // pred_check
        %p150 = pneg %p149
      $region18: #{tpu_custom_call.1} parent=5 // pred_check_branch
        %152 = sbr.rel (%p150) target = $region20
      $region19: #{tpu_custom_call.1} parent=5 // pred_region
        // Predicated region
        $region21: #{tpu_custom_call.1} parent=19 // pred_check
          %p153 = pneg %p58
        $region22: #{tpu_custom_call.1} parent=19 // pred_check_branch
          %155 = sbr.rel (%p153) target = $region24
        $region23: #{tpu_custom_call.1} parent=19 // pred_region
          %s156 = sand.u32 %s48, 1
          %s157 = scalar_lea.sflag [#allocation4], %s156
          %s158 = sand.u32 %s48, 1
          %s159 = smul.addr %s158, 16
          %s160 = scalar_lea.vmem [#allocation3], %s159
          %s161 = smul.u32 4, %s24
          %163 = vsyncadd %s157, 0
          %s164 = smul.addr %s22, 8
          %s165 = sadd.s32 %s161, %s164
          %s166 = smul.addr %s23, 8
          %s167 = sadd.s32 %s165, %s166
          %s168 = smul.addr %s167, 4
          %s169 = scalar_lea.hbm %s0, %s168
          %s171 = sshll.u32 %s169, 4
          %s172 = int_to_ptr.hbm [resolvable:$true] %s171
          %s173 = sshll.u32 %s160, 4
          %s174 = int_to_ptr.vmem [resolvable:$true] %s173
          %176 = dma.hbm_to_vmem [thread:$0]  %s172, 256, %s174, %s157
        $region24: #{tpu_custom_call.1} parent=19 // pred_fallthru
          _
      $region20: #{tpu_custom_call.1} parent=5 // pred_fallthru
        _
      %p177 = scmp.le.s32.totalorder 1, %s15
      %p178 = scmp.lt.s32.totalorder %s15, 5
      %p179 = pnand %p177, %p178
      %p180 = pneg %p179
      // Predicated region
      $region25: #{tpu_custom_call.1} parent=5 // pred_check
        _
      $region26: #{tpu_custom_call.1} parent=5 // pred_check_branch
        %182 = sbr.rel (%p179) target = $region28
      $region27: #{tpu_custom_call.1} parent=5 // pred_region
        %s183 = ssub.s32 %s15, 1
        %s184 = sand.u32 %s51, 1
        %s185 = scalar_lea.sflag [#allocation4], %s184
        %s186 = sand.u32 %s51, 1
        %s187 = smul.addr %s186, 16
        %s188 = scalar_lea.vmem [#allocation3], %s187
        // Predicated region
        $region29: #{tpu_custom_call.1} parent=27 // pred_check
          %p189 = pneg %p64
        $region30: #{tpu_custom_call.1} parent=27 // pred_check_branch
          %191 = sbr.rel (%p189) target = $region32
        $region31: #{tpu_custom_call.1} parent=27 // pred_region
          %193 = dma.done %s185, 256
        $region32: #{tpu_custom_call.1} parent=27 // pred_fallthru
          _
        // Predicated region
        $region33: #{tpu_custom_call.1} parent=27 // pred_check
          %p194 = pneg %p90
        $region34: #{tpu_custom_call.1} parent=27 // pred_check_branch
          %196 = sbr.rel (%p194) target = $region36
        $region35: #{tpu_custom_call.1} parent=27 // pred_region
          %198 = dma.done [#allocation7], 64
        $region36: #{tpu_custom_call.1} parent=27 // pred_fallthru
          _
        %s199 = sand.u32 %s51, 1
        %s200 = scalar_lea.sflag [#allocation4], %s199
        %s201 = sand.u32 %s51, 1
        %s202 = smul.addr %s201, 16
        %s203 = scalar_lea.vmem [#allocation3], %s202
        %p204 = pneg %p64
        %p205 = pneg %p61
        %p206 = pneg %p90
        %p207 = pneg %p87
        %p208 = pneg %p120
        %p209 = pneg %p117
        %s210 = sand.u32 %s107, 1
        %s211 = scalar_lea.sflag [#allocation5], %s210
        %s212 = sand.u32 %s107, 1
        %s213 = smul.addr %s212, 16
        %s214 = scalar_lea.vmem [#allocation8], %s213
        %s215 = smul.u32 4, %s27
        %s216 = smul.u32 4, %s27
        %p217 = scmp.eq.s32.totalorder %s27, 0
        // Predicated region
        $region37: #{tpu_custom_call.1} parent=27 // pred_check
          %p218 = pneg %p217
        $region38: #{tpu_custom_call.1} parent=27 // pred_check_branch
          %220 = sbr.rel (%p218) target = $region40
        $region39: #{tpu_custom_call.1} parent=27 // pred_region
          %v221 = vld [vmem:[#allocation6] sm:$0xf]
          %vm222 = vcmask 125952
          %223 = vst.msk [vmem:[#allocation2] sm:$0xf] %vm222, %v221
          %v224 = vld [vmem:[#allocation2] sm:$0xf]
          %226 = vrot.lane.b32.xlu0 %v224, 16
          %v227 = vpop.permute.xlu0 %226
          %vm229 = vcmask 257152
          %230 = vst.msk [vmem:[#allocation2] sm:$0xf] %vm229, %v227
          %v231 = vld [vmem:[#allocation2] sm:$0xf]
          %233 = vrot.lane.b32.xlu0 %v231, 32
          %v234 = vpop.permute.xlu0 %233
          %vm236 = vcmask 519424
          %237 = vst.msk [vmem:[#allocation2] sm:$0xf] %vm236, %v234
          %v238 = vld [vmem:[#allocation2] sm:$0xf]
          %240 = vrot.lane.b32.xlu0 %v238, 64
          %v241 = vpop.permute.xlu0 %240
          %vm243 = vcmask 1043968
          %244 = vst.msk [vmem:[#allocation2] sm:$0xf] %vm243, %v241
          %v245 = vld [vmem:[#allocation2] sm:$0xf]
          %246 = vst [vmem:[#allocation2 + $0x4] sm:$0xf] %v245
          %v247 = vld [vmem:[#allocation2] sm:$0xff]
          %248 = vst [vmem:[#allocation2 + $0x8] sm:$0xff] %v247
        $region40: #{tpu_custom_call.1} parent=27 // pred_fallthru
          _
        %v249 = vld [vmem:[%s188] sm:$0xff]
        %v250 = vld [vmem:[%s188 + $0x8] sm:$0xff]
        %v251 = vld [vmem:[#allocation2] sm:$0xff]
        %v252 = vld [vmem:[#allocation2 + $0x8] sm:$0xff]
        %v253 = vadd.f32 %v249, %v251
        %v254 = vadd.f32 %v250, %v252
        %255 = vst [vmem:[%s214] sm:$0xff] %v253
        %256 = vst [vmem:[%s214 + $0x8] sm:$0xff] %v254
        %s257 = sand.u32 %s107, 1
        %s258 = scalar_lea.sflag [#allocation5], %s257
        %s259 = sand.u32 %s107, 1
        %s260 = smul.addr %s259, 16
        %s261 = scalar_lea.vmem [#allocation8], %s260
        // Predicated region
        $region41: #{tpu_custom_call.1} parent=27 // pred_check
          %p262 = pneg %p117
        $region42: #{tpu_custom_call.1} parent=27 // pred_check_branch
          %264 = sbr.rel (%p262) target = $region44
        $region43: #{tpu_custom_call.1} parent=27 // pred_region
          %s265 = smul.u32 4, %s27
          %267 = vsyncadd %s258, 0
          %s268 = smul.addr %s25, 8
          %s269 = sadd.s32 %s265, %s268
          %s270 = smul.addr %s26, 8
          %s271 = sadd.s32 %s269, %s270
          %s272 = smul.addr %s271, 4
          %s273 = scalar_lea.hbm %s2, %s272
          %s275 = sshll.u32 %s261, 4
          %s276 = int_to_ptr.vmem [resolvable:$true] %s275
          %s277 = sshll.u32 %s273, 4
          %s278 = int_to_ptr.hbm [resolvable:$true] %s277
          %280 = dma.vmem_to_hbm [thread:$0]  %s276, 256, %s278, %s258
        $region44: #{tpu_custom_call.1} parent=27 // pred_fallthru
          _
      $region28: #{tpu_custom_call.1} parent=5 // pred_fallthru
        _
      %p281 = scmp.le.s32.totalorder 2, %s15
      // Predicated region
      $region45: #{tpu_custom_call.1} parent=5 // pred_check
        %p282 = pneg %p281
      $region46: #{tpu_custom_call.1} parent=5 // pred_check_branch
        %284 = sbr.rel (%p282) target = $region48
      $region47: #{tpu_custom_call.1} parent=5 // pred_region
        %s285 = ssub.s32 %s15, 2
        // Predicated region
        $region49: #{tpu_custom_call.1} parent=47 // pred_check
          %p286 = pneg %p123
        $region50: #{tpu_custom_call.1} parent=47 // pred_check_branch
          %288 = sbr.rel (%p286) target = $region52
        $region51: #{tpu_custom_call.1} parent=47 // pred_region
          %s289 = sand.u32 %s108, 1
          %s290 = scalar_lea.sflag [#allocation5], %s289
          %s291 = sand.u32 %s108, 1
          %s292 = smul.addr %s291, 16
          %s293 = scalar_lea.vmem [#allocation8], %s292
          %295 = dma.done %s290, 256
        $region52: #{tpu_custom_call.1} parent=47 // pred_fallthru
          _
      $region48: #{tpu_custom_call.1} parent=5 // pred_fallthru
        _
    $region6: #{tpu_custom_call.1} parent=1 // loop_footer
      %s19 = sadd.s32 1, %s15
    $region7: #{tpu_custom_call.1} parent=1 // loop_footer_branch
      %14 = sbr.rel target = $region3
    $region8: #{tpu_custom_call.1} parent=1 // loop_exit
      _
    %296 = vsyncpa [#allocation4], 1
    %s297 = scalar_lea.sflag [#allocation4], 1
    %298 = vsyncpa %s297, 1
    %299 = vsyncpa [#allocation7], 1
    %300 = vsyncpa [#allocation5], 1
    %s301 = scalar_lea.sflag [#allocation5], 1
    %302 = vsyncpa %s301, 1

</llo_original>
